<compile_context>
chip_gen: v7x
topology: tpu7x:2x2x1
jax: 0.10.0
libtpu: 0.0.40
codegen_flags: <defaults>
</compile_context>

<pallas_src>
import jax
import jax.numpy as jnp
from jax.experimental import pallas as pl
from jax.experimental.pallas import tpu as pltpu


# ---------------------------------------------------------------------------
# Kernel 1: fused node projections
#   f_cat = nfeats @ [W_ni | W_nj | W_node] + [0 | 0 | b_node]
# ---------------------------------------------------------------------------
def node_proj_kernel(nf_ref, wcat_ref, bcat_ref, out_ref):
    out_ref[...] = (
        jnp.dot(nf_ref[...], wcat_ref[...], preferred_element_type=jnp.float32)
        + bcat_ref[...]
    )


# ---------------------------------------------------------------------------
# Kernel 2: edge features + edge-softmax attention + aggregation.
# Grid = (dst_blocks, src_blocks); online softmax state in VMEM scratch:
#   m_sc, l_sc : [H, 1, TD]  running max / sum   (lane axis = dst)
#   acc_sc     : [H, TD, Fn] running weighted sum of src node features
# ---------------------------------------------------------------------------
def egat_edge_kernel(f_ni_ref, f_nj_ref, hsrc_ref, ef_ref, wfij_ref, attn_ref,
                     bias_ref, fout_ref, hout_ref, m_sc, l_sc, acc_sc):
    TS, TD, De = ef_ref.shape
    HFe = f_ni_ref.shape[1]
    H = hsrc_ref.shape[0]
    Fe = HFe // H

    i = pl.program_id(1)                       # src block index (reduction axis)

    @pl.when(i == 0)
    def _init():
        m_sc[...] = jnp.full_like(m_sc, -jnp.inf)
        l_sc[...] = jnp.zeros_like(l_sc)
        acc_sc[...] = jnp.zeros_like(acc_sc)

    # --- edge projection + u_add_v + bias + leaky_relu(0.01) -----------------
    ef2 = ef_ref[...].reshape(TS * TD, De)
    f_fij = jnp.dot(ef2, wfij_ref[...], preferred_element_type=jnp.float32)
    f_fij = f_fij.reshape(TS, TD, HFe)
    f_out = (f_ni_ref[...][:, None, :]         # broadcast over dst
             + f_nj_ref[...][None, :, :]       # broadcast over src
             + f_fij
             + bias_ref[...][None, :, :])
    f_out = jnp.where(f_out > 0, f_out, 0.01 * f_out)
    fout_ref[...] = f_out                      # [TS, TD, HFe] edge-feature output

    # --- attention scores, head-major: e[h, s, d] (lane axis = dst) ----------
    attn_all = attn_ref[...]                                   # [H, Fe]
    e_parts = []
    for h in range(H):                                         # static unroll, H small
        w_h = attn_all[h:h + 1, :].reshape(1, 1, Fe)
        e_h = jnp.sum(f_out[:, :, h * Fe:(h + 1) * Fe] * w_h, axis=-1)  # [TS, TD]
        e_parts.append(e_h[None])
    e_hm = jnp.concatenate(e_parts, axis=0)                    # [H, TS, TD]

    # --- online softmax over the src axis (axis=1), per head, per dst lane ---
    m_prev = m_sc[...]                                          # [H, 1, TD]
    m_new = jnp.maximum(m_prev, jnp.max(e_hm, axis=1, keepdims=True))
    corr = jnp.exp(m_prev - m_new)                              # [H, 1, TD]
    p = jnp.exp(e_hm - m_new)                                   # [H, TS, TD]
    l_sc[...] = corr * l_sc[...] + jnp.sum(p, axis=1, keepdims=True)
    m_sc[...] = m_new

    # --- head-batched aggregation: acc[h,d,f] += sum_s p[h,s,d] * hsrc[h,s,f] -
    contrib = jnp.einsum('hsd,hsf->hdf', p, hsrc_ref[...],
                         preferred_element_type=jnp.float32)    # [H, TD, Fn]
    corr_t = jnp.transpose(corr, (0, 2, 1))                     # [H, TD, 1]
    acc_sc[...] = corr_t * acc_sc[...] + contrib

    # --- finalize this dst block on the last src block ------------------------
    @pl.when(i == pl.num_programs(1) - 1)
    def _finish():
        inv_l = pl.reciprocal(l_sc[...], approx=True)           # [H, 1, TD]
        inv_l_t = jnp.transpose(inv_l, (0, 2, 1))               # [H, TD, 1]
        hout_ref[...] = (acc_sc[...] * inv_l_t).astype(hout_ref.dtype)


# ---------------------------------------------------------------------------
# Wrapper
# ---------------------------------------------------------------------------
def egat_forward(nfeats, efeats_dense, W_node, b_node, W_ni, W_nj, W_fij, attn,
                 bias, num_heads, out_node_feats, out_edge_feats,
                 src_tile=None, dst_tile=None):
    N, Dn = nfeats.shape
    De = efeats_dense.shape[-1]
    H, Fn, Fe = num_heads, out_node_feats, out_edge_feats
    HFn, HFe = H * Fn, H * Fe

    # ---- fused node-side projections: one lane-dense matmul ----
    W_cat = jnp.concatenate([W_ni, W_nj, W_node], axis=1)           # [Dn, 2HFe+HFn]
    b_cat = jnp.concatenate(
        [jnp.zeros((2 * HFe,), jnp.float32), b_node]).reshape(1, -1)
    Wtot = 2 * HFe + HFn
    TN = N if N <= 256 else 256
    assert N % TN == 0
    f_cat = pl.pallas_call(
        node_proj_kernel,
        out_shape=jax.ShapeDtypeStruct((N, Wtot), jnp.float32),
        grid_spec=pltpu.PrefetchScalarGridSpec(
            num_scalar_prefetch=0,
            grid=(N // TN,),
            in_specs=[
                pl.BlockSpec((TN, Dn), lambda n: (n, 0)),
                pl.BlockSpec((Dn, Wtot), lambda n: (0, 0)),
                pl.BlockSpec((1, Wtot), lambda n: (0, 0)),
            ],
            out_specs=pl.BlockSpec((TN, Wtot), lambda n: (n, 0)),
        ),
        compiler_params=pltpu.CompilerParams(
            dimension_semantics=("parallel",)),
    )(nfeats, W_cat, b_cat)

    f_ni = f_cat[:, :HFe]                    # [N, HFe]   fc_ni(nfeats)
    f_nj = f_cat[:, HFe:2 * HFe]             # [N, HFe]   fc_nj(nfeats)
    h_src = f_cat[:, 2 * HFe:]               # [N, HFn]   fc_node(nfeats) + bias
    hsrc_hm = h_src.reshape(N, H, Fn).transpose(1, 0, 2)   # [H, N, Fn] head-major

    # ---- tile sizes: largest that fits comfortably (<= 128 keeps v7x happy) ----
    TS = src_tile or min(N, 128)
    TD = dst_tile or min(N, 128)
    assert N % TS == 0 and N % TD == 0
    assert (TS % 8 == 0 or TS == N) and (TD % 8 == 0 or TD == N)
    grid = (N // TD, N // TS)   # (dst blocks, src blocks); src last = reduction axis

    fout3, hout_hm = pl.pallas_call(
        egat_edge_kernel,
        out_shape=(
            jax.ShapeDtypeStruct((N, N, HFe), jnp.float32),   # f_out (src, dst, H*Fe)
            jax.ShapeDtypeStruct((H, N, Fn), jnp.float32),    # h_out, head-major
        ),
        grid_spec=pltpu.PrefetchScalarGridSpec(
            num_scalar_prefetch=0,
            grid=grid,
            in_specs=[
                pl.BlockSpec((TS, HFe), lambda j, i: (i, 0)),        # f_ni   (src)
                pl.BlockSpec((TD, HFe), lambda j, i: (j, 0)),        # f_nj   (dst)
                pl.BlockSpec((H, TS, Fn), lambda j, i: (0, i, 0)),   # h_src  (src, head-major)
                pl.BlockSpec((TS, TD, De), lambda j, i: (i, j, 0)),  # efeats tile
                pl.BlockSpec((De, HFe), lambda j, i: (0, 0)),        # W_fij
                pl.BlockSpec((H, Fe), lambda j, i: (0, 0)),          # attn
                pl.BlockSpec((1, HFe), lambda j, i: (0, 0)),         # bias
            ],
            out_specs=(
                pl.BlockSpec((TS, TD, HFe), lambda j, i: (i, j, 0)),
                pl.BlockSpec((H, TD, Fn), lambda j, i: (0, j, 0)),   # resident across i
            ),
            scratch_shapes=[
                pltpu.VMEM((H, 1, TD), jnp.float32),    # running max
                pltpu.VMEM((H, 1, TD), jnp.float32),    # running sum
                pltpu.VMEM((H, TD, Fn), jnp.float32),   # running aggregate
            ],
        ),
        compiler_params=pltpu.CompilerParams(
            dimension_semantics=("parallel", "arbitrary"),
            vmem_limit_bytes=48 * 1024 * 1024,
        ),
    )(f_ni, f_nj, hsrc_hm, efeats_dense, W_fij, attn, bias.reshape(1, HFe))

    h_out = hout_hm.transpose(1, 0, 2)        # [num_nodes, num_heads, out_node_feats]
    f_out = fout3.reshape(N * N, H, Fe)       # [num_edges, num_heads, out_edge_feats]
    return h_out, f_out


# ---------------------------------------------------------------------------
# Pure-JAX reference (matches the PyTorch module on the complete graph)
# ---------------------------------------------------------------------------
def reference(nfeats, efeats_dense, W_node, b_node, W_ni, W_nj, W_fij, attn, bias,
              H, Fn, Fe):
    N = nfeats.shape[0]
    f_ni = nfeats @ W_ni
    f_nj = nfeats @ W_nj
    f_fij = efeats_dense.reshape(N * N, -1) @ W_fij
    f_out = (f_ni[:, None, :] + f_nj[None, :, :]).reshape(N * N, -1) + f_fij + bias
    f_out = jnp.where(f_out > 0, f_out, 0.01 * f_out)
    f_out_h = f_out.reshape(N * N, H, Fe)
    e = (f_out_h * attn[None]).sum(-1).reshape(N, N, H)
    a = jax.nn.softmax(e, axis=0)
    h_src = (nfeats @ W_node + b_node).reshape(N, H, Fn)
    h_out = jnp.einsum('ijh,ihf->jhf', a, h_src)
    return h_out, f_out_h


def xavier_normal(key, out_dim, in_dim, gain):
    std = gain * (2.0 / (in_dim + out_dim)) ** 0.5
    # torch weight layout is [out, in]; return transposed [in, out] for x @ W
    return (std * jax.random.normal(key, (out_dim, in_dim), dtype=jnp.float32)).T


def _run_case(key, N, in_node_feats, in_edge_feats, out_node_feats, out_edge_feats,
              num_heads, src_tile=None, dst_tile=None):
    H, Fn, Fe = num_heads, out_node_feats, out_edge_feats
    gain = 2.0 ** 0.5  # init.calculate_gain('relu')
    k = jax.random.split(key, 8)

    nfeats = jax.random.normal(k[0], (N, in_node_feats), dtype=jnp.float32)
    efeats = jax.random.normal(k[1], (N, N, in_edge_feats), dtype=jnp.float32)

    W_node = xavier_normal(k[2], H * Fn, in_node_feats, gain)        # [Dn, H*Fn]
    b_node = (jax.random.uniform(k[3], (H * Fn,), dtype=jnp.float32) - 0.5) \
             * (2.0 / (in_node_feats ** 0.5))
    W_ni = xavier_normal(k[4], H * Fe, in_node_feats, gain)          # [Dn, H*Fe]
    W_nj = xavier_normal(k[5], H * Fe, in_node_feats, gain)          # [Dn, H*Fe]
    W_fij = xavier_normal(k[6], H * Fe, in_edge_feats, gain)         # [De, H*Fe]
    attn = gain * (2.0 / (H * Fe + Fe)) ** 0.5 \
           * jax.random.normal(k[7], (H, Fe), dtype=jnp.float32)
    bias = jnp.zeros((H * Fe,), dtype=jnp.float32)

    h_out, f_out = egat_forward(nfeats, efeats, W_node, b_node, W_ni, W_nj, W_fij,
                                attn, bias, H, Fn, Fe,
                                src_tile=src_tile, dst_tile=dst_tile)
    jax.block_until_ready((h_out, f_out))

    h_ref, f_ref = reference(nfeats, efeats, W_node, b_node, W_ni, W_nj, W_fij,
                             attn, bias, H, Fn, Fe)
    assert h_out.shape == (N, H, Fn) and f_out.shape == (N * N, H, Fe)
    assert jnp.allclose(h_out, h_ref, rtol=1e-2, atol=1e-2), "h_out mismatch"
    assert jnp.allclose(f_out, f_ref, rtol=1e-2, atol=1e-2), "f_out mismatch"


if __name__ == "__main__":
    key = jax.random.PRNGKey(0)
    k1, k2 = jax.random.split(key)

    # Case 1: tiny graph, single-block grid (8 nodes, complete graph -> 64 edges).
    _run_case(k1, N=8, in_node_feats=16, in_edge_feats=8,
              out_node_feats=16, out_edge_feats=8, num_heads=4)

    # Case 2: multi-block grid (4 dst blocks x 4 src blocks) exercising the
    # online softmax across src blocks and the parallel dst axis.
    _run_case(k2, N=64, in_node_feats=16, in_edge_feats=8,
              out_node_feats=16, out_edge_feats=8, num_heads=4,
              src_tile=16, dst_tile=16)

    print("KERNEL_OK")
</pallas_src>

<mosaic_0001>
module attributes {stable_mosaic.version = 11 : i64} {
  func.func @node_proj_kernel(%arg0: i32, %arg1: memref<8x16xf32, #tpu.memory_space<vmem>>, %arg2: memref<16x128xf32, #tpu.memory_space<vmem>>, %arg3: memref<1x128xf32, #tpu.memory_space<vmem>>, %arg4: memref<8x128xf32, #tpu.memory_space<vmem>>) attributes {dimension_semantics = [#tpu.dimension_semantics<parallel>], iteration_bounds = array<i64: 1>, scalar_prefetch = 0 : i64, scratch_operands = 0 : i64, tpu.core_type = #tpu.core_type<tc>, window_params = [{transform_indices = @transform_0, window_bounds = array<i64: 8, 16>}, {pipeline_mode = #tpu.pipeline_mode<synchronous>, transform_indices = @transform_1, window_bounds = array<i64: 16, 128>}, {pipeline_mode = #tpu.pipeline_mode<synchronous>, transform_indices = @transform_2, window_bounds = array<i64: 1, 128>}, {transform_indices = @transform_3, window_bounds = array<i64: 8, 128>}]} {
    %c0 = arith.constant 0 : index
    %c0_0 = arith.constant 0 : index
    %0 = vector.load %arg1[%c0, %c0_0] : memref<8x16xf32, #tpu.memory_space<vmem>>, vector<8x16xf32>
    %c0_1 = arith.constant 0 : index
    %c0_2 = arith.constant 0 : index
    %1 = vector.load %arg2[%c0_1, %c0_2] : memref<16x128xf32, #tpu.memory_space<vmem>>, vector<16x128xf32>
    %cst = arith.constant dense<0.000000e+00> : vector<8x128xf32>
    %2 = tpu.matmul %0, %1, %cst {dimension_numbers = #tpu.dot_dimension_numbers<[1], [0], [0], [1], [0, 0, 1, 1], [], []>} : vector<8x16xf32>, vector<16x128xf32>, vector<8x128xf32> -> vector<8x128xf32>
    %c0_3 = arith.constant 0 : index
    %c0_4 = arith.constant 0 : index
    %3 = vector.load %arg3[%c0_3, %c0_4] : memref<1x128xf32, #tpu.memory_space<vmem>>, vector<1x128xf32>
    %4 = vector.broadcast %3 : vector<1x128xf32> to vector<8x128xf32>
    %5 = arith.addf %2, %4 : vector<8x128xf32>
    %c0_5 = arith.constant 0 : index
    %c0_6 = arith.constant 0 : index
    %6 = vector.load %arg4[%c0_5, %c0_6] : memref<8x128xf32, #tpu.memory_space<vmem>>, vector<8x128xf32>
    tpu.vector_store %arg4[%c0_5, %c0_6], %5 {strides = array<i32>} : memref<8x128xf32, #tpu.memory_space<vmem>>, vector<8x128xf32>,
    return
  }
  func.func @transform_0(%arg0: i32) -> (i32, i32) {
    %c0_i32 = arith.constant 0 : i32
    %c0_i32_0 = arith.constant 0 : i32
    return %arg0, %c0_i32 : i32, i32
  }
  func.func @transform_1(%arg0: i32) -> (i32, i32) {
    %c0_i32 = arith.constant 0 : i32
    %c0_i32_0 = arith.constant 0 : i32
    %c0_i32_1 = arith.constant 0 : i32
    return %c0_i32, %c0_i32_0 : i32, i32
  }
  func.func @transform_2(%arg0: i32) -> (i32, i32) {
    %c0_i32 = arith.constant 0 : i32
    %c0_i32_0 = arith.constant 0 : i32
    %c0_i32_1 = arith.constant 0 : i32
    return %c0_i32, %c0_i32_0 : i32, i32
  }
  func.func @transform_3(%arg0: i32) -> (i32, i32) {
    %c0_i32 = arith.constant 0 : i32
    %c0_i32_0 = arith.constant 0 : i32
    return %arg0, %c0_i32 : i32, i32
  }
}

</mosaic_0001>

<llo_original>
// kernel: tpu_custom_call.1
$region0: #{tpu_custom_call.1}
  #allocation0 [shape = 'u32[]', space=smem, size = 0x4, offset = 0x4, fixed_abs, tag = 'smem constant byte address 0x4 - core index']
  #allocation1 [shape = 'u32[144,128]{1,0:T(1,128)}', space=vmem, size = 0x12000, scoped, tag = 'internal scratch']
  %s0 = inlined_call_operand.hbm [shape: f32[8,16], index: 0, kind: input, shape index: {}]
  %s1 = inlined_call_operand.hbm [shape: f32[16,128], index: 1, kind: input, shape index: {}]
  %s2 = inlined_call_operand.vmem [shape: f32[1,128], index: 2, kind: input, shape index: {}]
  %s3 = inlined_call_operand.hbm [shape: f32[8,128], index: 3, kind: output, shape index: {}]
  %s4 = sld [smem:[#allocation0]]
  $region30: #{tpu_custom_call.1} parent=0
    _
  %s6 = ssub.s32 1, %s4
  %s7 = scalar_select 0, %s6, %s4
  $region1: #{tpu_custom_call.1} parent=0
    #allocation2 [shape = 'u8[4096]{0}', space=vmem, size = 0x1000, scoped, tag = 'input window, operand 0, single buffered']
    #allocation3 [shape = 's32[1]{0}', space=sflag, size = 0x4, scoped, tag = 'scoped memory for tpu_custom_call.1']
    #allocation4 [shape = 's32[1]{0}', space=sflag, size = 0x4, scoped, tag = 'scoped memory for tpu_custom_call.1']
    #allocation5 [shape = 'u8[8192]{0}', space=vmem, size = 0x2000, scoped, tag = 'input window, operand 1, single buffered']
    #allocation6 [shape = 's32[1]{0}', space=sflag, size = 0x4, scoped, tag = 'scoped memory for tpu_custom_call.1']
    #allocation7 [shape = 'u8[4096]{0}', space=vmem, size = 0x1000, scoped, tag = 'output window, operand 0, single buffered']
    %8 = vsyncpa [#allocation3], 0
    %9 = vsyncpa [#allocation6], 0
    %10 = vsyncpa [#allocation4], 0
    // Predicated region
    $region2: #{tpu_custom_call.1} parent=1 // pred_check
      _
    $region3: #{tpu_custom_call.1} parent=1 // pred_check_branch
      %12 = sbr.rel (0) target = $region5
    $region4: #{tpu_custom_call.1} parent=1 // pred_region
      %s14 = ssub.s32 128, 128
      %15 = vsyncadd [#allocation3], %s14
      %s17 = sshll.u32 [#allocation2], 4
      %s18 = int_to_ptr.vmem [resolvable:$true] %s17
      %20 = dma.hbm_to_vmem [thread:$0]  %s0, 128, %s18, [#allocation3]
    $region5: #{tpu_custom_call.1} parent=1 // pred_fallthru
      _
    // Predicated region
    $region6: #{tpu_custom_call.1} parent=1 // pred_check
      _
    $region7: #{tpu_custom_call.1} parent=1 // pred_check_branch
      %22 = sbr.rel (0) target = $region9
    $region8: #{tpu_custom_call.1} parent=1 // pred_region
      %s24 = ssub.s32 256, 256
      %25 = vsyncadd [#allocation6], %s24
      %s26 = sshll.u32 [#allocation5], 4
      %s27 = int_to_ptr.vmem [resolvable:$true] %s26
      %32 = dma.hbm_to_vmem [thread:$0]  %s1, 256, %s27, [#allocation6], 128, 128, 8
    $region9: #{tpu_custom_call.1} parent=1 // pred_fallthru
      _
    // Predicated region
    $region10: #{tpu_custom_call.1} parent=1 // pred_check
      _
    $region11: #{tpu_custom_call.1} parent=1 // pred_check_branch
      %34 = sbr.rel (0) target = $region13
    $region12: #{tpu_custom_call.1} parent=1 // pred_region
      _
    $region13: #{tpu_custom_call.1} parent=1 // pred_fallthru
      _
    // Predicated region
    $region14: #{tpu_custom_call.1} parent=1 // pred_check
      _
    $region15: #{tpu_custom_call.1} parent=1 // pred_check_branch
      %36 = sbr.rel (0) target = $region17
    $region16: #{tpu_custom_call.1} parent=1 // pred_region
      %37 = dma.done [#allocation3], 128
    $region17: #{tpu_custom_call.1} parent=1 // pred_fallthru
      _
    // Predicated region
    $region18: #{tpu_custom_call.1} parent=1 // pred_check
      _
    $region19: #{tpu_custom_call.1} parent=1 // pred_check_branch
      %39 = sbr.rel (0) target = $region21
    $region20: #{tpu_custom_call.1} parent=1 // pred_region
      %40 = dma.done [#allocation6], 256
    $region21: #{tpu_custom_call.1} parent=1 // pred_fallthru
      _
    %v41 = vld [vmem:[#allocation2] sm:$0xff]
    %v42 = vld [vmem:[#allocation5] sm:$0xff]
    %v43 = vld [vmem:[#allocation5 + $0x8] sm:$0xff]
    %v44 = vld [vmem:[%s2] sm:$0x1]
    %v46 = vlaneseq
    %v47 = vshrl.u32 %v46, 7
    %v48 = vsub.s32 0, %v47
    %v49 = vrot.slane %v44, %v48
    %vm51 = vcmask 130048
    %v53 = vsel %vm51, %v41, 0
    %55 = vmatprep.subr.mxu0 0.0
    %56 = vmatpush1.msra.mxu0 %v42
    %57 = vmatprep.subr.mxu0 0.0
    %58 = vmatpush1.msra.mxu0 %v43
    %59 = vmatprep.subr.mxu0 0.0
    %60 = vmatpush1.msra.mxu0 0.0
    %61 = vmatprep.subr.mxu0 0.0
    %62 = vmatpush1.msra.mxu0 0.0
    %63 = vmatprep.subr.mxu0 0.0
    %64 = vmatpush1.msra.mxu0 0.0
    %65 = vmatprep.subr.mxu0 0.0
    %66 = vmatpush1.msra.mxu0 0.0
    %67 = vmatprep.subr.mxu0 0.0
    %68 = vmatpush1.msra.mxu0 0.0
    %69 = vmatprep.subr.mxu0 0.0
    %70 = vmatpush1.msra.mxu0 0.0
    %71 = vmatprep.subr.mxu0 0.0
    %72 = vmatpush1.msra.mxu0 0.0
    %73 = vmatprep.subr.mxu0 0.0
    %74 = vmatpush1.msra.mxu0 0.0
    %75 = vmatprep.subr.mxu0 0.0
    %76 = vmatpush1.msra.mxu0 0.0
    %77 = vmatprep.subr.mxu0 0.0
    %78 = vmatpush1.msra.mxu0 0.0
    %79 = vmatprep.subr.mxu0 0.0
    %80 = vmatpush1.msra.mxu0 0.0
    %81 = vmatprep.subr.mxu0 0.0
    %82 = vmatpush1.msra.mxu0 0.0
    %83 = vmatprep.subr.mxu0 0.0
    %84 = vmatpush1.msra.mxu0 0.0
    %85 = vmatprep.subr.mxu0 0.0
    %86 = vmatpush1.msra.mxu0 0.0
    %87 = vmatprep.subr.mxu0 0.0
    %88 = vmatpush1.msra.mxu0 0.0
    %89 = vmatprep.subr.mxu0 0.0
    %90 = vmatpush1.msra.mxu0 0.0
    %91 = vmatprep.subr.mxu0 0.0
    %92 = vmatpush1.msra.mxu0 0.0
    %93 = vmatprep.subr.mxu0 0.0
    %94 = vmatpush1.msra.mxu0 0.0
    %95 = vmatprep.subr.mxu0 0.0
    %96 = vmatpush1.msra.mxu0 0.0
    %97 = vmatprep.subr.mxu0 0.0
    %98 = vmatpush1.msra.mxu0 0.0
    %99 = vmatprep.subr.mxu0 0.0
    %100 = vmatpush1.msra.mxu0 0.0
    %101 = vmatprep.subr.mxu0 0.0
    %102 = vmatpush1.msra.mxu0 0.0
    %103 = vmatprep.subr.mxu0 0.0
    %104 = vmatpush1.msra.mxu0 0.0
    %105 = vmatprep.subr.mxu0 0.0
    %106 = vmatpush1.msra.mxu0 0.0
    %107 = vmatprep.subr.mxu0 0.0
    %108 = vmatpush1.msra.mxu0 0.0
    %109 = vmatprep.subr.mxu0 0.0
    %110 = vmatpush1.msra.mxu0 0.0
    %111 = vmatprep.subr.mxu0 0.0
    %112 = vmatpush1.msra.mxu0 0.0
    %113 = vmatprep.subr.mxu0 0.0
    %114 = vmatpush1.msra.mxu0 0.0
    %115 = vmatprep.subr.mxu0 0.0
    %116 = vmatpush1.msra.mxu0 0.0
    %117 = vmatprep.subr.mxu0 0.0
    %118 = vmatpush1.msra.mxu0 0.0
    %119 = vmatprep.mubr.f32.mxu0 0.0
    %120 = vmatmul.mubr.f32.gmra.mrb[0].mxu0 %v53
    %v121 = vpop.f32.mrb[0].mxu0
    %v122 = vadd.f32 %v49, %v121
    %v123 = vpop.f32.mrb[0].mxu0
    %124 = vdwg.mxu0
    %125 = vst [vmem:[#allocation7] sm:$0xff] %v122
    // Predicated region
    $region22: #{tpu_custom_call.1} parent=1 // pred_check
      _
    $region23: #{tpu_custom_call.1} parent=1 // pred_check_branch
      %127 = sbr.rel (0) target = $region25
    $region24: #{tpu_custom_call.1} parent=1 // pred_region
      %s129 = ssub.s32 128, 128
      %130 = vsyncadd [#allocation4], %s129
      %s132 = sshll.u32 [#allocation7], 4
      %s133 = int_to_ptr.vmem [resolvable:$true] %s132
      %135 = dma.vmem_to_hbm [thread:$0]  %s133, 128, %s3, [#allocation4]
    $region25: #{tpu_custom_call.1} parent=1 // pred_fallthru
      _
    // Predicated region
    $region26: #{tpu_custom_call.1} parent=1 // pred_check
      _
    $region27: #{tpu_custom_call.1} parent=1 // pred_check_branch
      %137 = sbr.rel (0) target = $region29
    $region28: #{tpu_custom_call.1} parent=1 // pred_region
      %138 = dma.done [#allocation4], 128
    $region29: #{tpu_custom_call.1} parent=1 // pred_fallthru
      _
    %139 = vsyncpa [#allocation3], 1
    %140 = vsyncpa [#allocation6], 1
    %141 = vsyncpa [#allocation4], 1

</llo_original>
